<compile_context>
chip_gen: v7x
topology: tpu7x:2x2x1
jax: 0.10.0
libtpu: 0.0.40
codegen_flags: <defaults>
</compile_context>

<pallas_src>
import functools

import jax
import jax.numpy as jnp
from jax.experimental import pallas as pl
from jax.experimental.pallas import tpu as pltpu


# -----------------------------------------------------------------------------
# Kernel helpers (operate on values living in VMEM)
# -----------------------------------------------------------------------------
def _lane_shift_zero(x, d):
    """out[:, p] = x[:, p + d], zero-filled where p + d falls outside [0, L)."""
    if d == 0:
        return x
    c, l = x.shape
    z = jnp.zeros((c, abs(d)), x.dtype)
    if d > 0:
        return jnp.concatenate([x[:, d:], z], axis=1)
    return jnp.concatenate([z, x[:, : l + d]], axis=1)


def _conv3x3_relu(x, w_mat, b_col, mask_l, mask_r, img_w):
    """x: (Cin, H*W); w_mat: (Cout, 9*Cin); b_col: (Cout, 1) -> (Cout, H*W)."""
    taps = []
    for kh in range(3):
        for kw in range(3):
            dh, dw = kh - 1, kw - 1
            t = _lane_shift_zero(x, dh * img_w + dw)
            # Flat shifts already zero-fill top/bottom overflow; only the
            # left/right image borders (row wrap-around) need masking.
            if dw == -1:
                t = jnp.where(mask_l, t, 0.0)
            elif dw == 1:
                t = jnp.where(mask_r, t, 0.0)
            taps.append(t)
    patches = jnp.concatenate(taps, axis=0)                 # (9*Cin, H*W)
    y = jnp.dot(w_mat, patches, preferred_element_type=jnp.float32)
    return jnp.maximum(y + b_col, 0.0)


# -----------------------------------------------------------------------------
# Fused kernel: conv3x3+ReLU -> conv3x3+ReLU -> convT(2x2, stride 2)
# -----------------------------------------------------------------------------
def upsample_kernel(x_ref, w1_ref, b1_ref, w2_ref, b2_ref, w3_ref, b3_ref,
                    o_ref, *, img_w):
    hw = x_ref.shape[-1]
    pos = jax.lax.broadcasted_iota(jnp.int32, (1, hw), 1)
    col = pos % img_w
    mask_l = col >= 1               # valid when sampling column (w - 1)
    mask_r = col < (img_w - 1)      # valid when sampling column (w + 1)

    x0 = x_ref[0].astype(jnp.float32)                       # (Cin,  H*W)
    x1 = _conv3x3_relu(x0, w1_ref[...], b1_ref[...], mask_l, mask_r, img_w)
    x2 = _conv3x3_relu(x1, w2_ref[...], b2_ref[...], mask_l, mask_r, img_w)

    # ConvTranspose2d(k=2, s=2): all 4 taps in one matmul.
    # Rows of w3/b3 are ordered r = (kh*2 + kw)*Cout + co.
    y = jnp.dot(w3_ref[...], x2, preferred_element_type=jnp.float32)
    y = y + b3_ref[...]
    o_ref[0] = y.astype(o_ref.dtype)                        # (4*Cout, H*W)


# -----------------------------------------------------------------------------
# Wrapper
# -----------------------------------------------------------------------------
@jax.jit
def upsample_forward(x_nchw, params):
    """Matches UpSample.forward. Weights are in PyTorch layouts:
       conv: (Cout, Cin, 3, 3); convT: (Cin, Cout, 2, 2)."""
    (w1, b1), (w2, b2), (w3, b3) = params
    n, cin, h, w = x_nchw.shape
    c1 = w1.shape[0]
    c2 = w2.shape[0]
    c3 = w3.shape[1]
    hw = h * w

    xf = x_nchw.reshape(n, cin, hw)                                   # free
    # Kernel-friendly weight layouts (tiny, constant-folded under jit).
    w1m = jnp.transpose(w1, (0, 2, 3, 1)).reshape(c1, 9 * cin)        # [co,(kh,kw,c)]
    w2m = jnp.transpose(w2, (0, 2, 3, 1)).reshape(c2, 9 * c1)
    w3m = jnp.transpose(w3, (2, 3, 1, 0)).reshape(4 * c3, c2)         # [(kh,kw,co),c]
    b1c = b1.reshape(c1, 1)
    b2c = b2.reshape(c2, 1)
    b3c = jnp.tile(b3.reshape(1, c3), (4, 1)).reshape(4 * c3, 1)

    y = pl.pallas_call(
        functools.partial(upsample_kernel, img_w=w),
        out_shape=jax.ShapeDtypeStruct((n, 4 * c3, hw), jnp.float32),
        grid=(n,),
        in_specs=[
            pl.BlockSpec((1, cin, hw), lambda i: (i, 0, 0)),
            pl.BlockSpec((c1, 9 * cin), lambda i: (0, 0)),
            pl.BlockSpec((c1, 1), lambda i: (0, 0)),
            pl.BlockSpec((c2, 9 * c1), lambda i: (0, 0)),
            pl.BlockSpec((c2, 1), lambda i: (0, 0)),
            pl.BlockSpec((4 * c3, c2), lambda i: (0, 0)),
            pl.BlockSpec((4 * c3, 1), lambda i: (0, 0)),
        ],
        out_specs=pl.BlockSpec((1, 4 * c3, hw), lambda i: (i, 0, 0)),
        compiler_params=pltpu.CompilerParams(
            dimension_semantics=("parallel",)),
    )(xf, w1m, b1c, w2m, b2c, w3m, b3c)

    # Tap interleave (single tiny copy) + free reshape back to NCHW.
    # y[n, (kh*2+kw)*Cout + co, h*W + w] -> out[n, co, 2h+kh, 2w+kw]
    y = y.reshape(n, 2, 2, c3, h, w)                  # (n, kh, kw, co, h, w)
    y = jnp.transpose(y, (0, 3, 4, 1, 5, 2))          # (n, co, h, kh, w, kw)
    return y.reshape(n, c3, 2 * h, 2 * w)


# -----------------------------------------------------------------------------
# Pure-JAX reference (for correctness check)
# -----------------------------------------------------------------------------
def reference_forward(x_nchw, params):
    (w1, b1), (w2, b2), (w3, b3) = params
    y = x_nchw
    for wgt, b in ((w1, b1), (w2, b2)):
        y = jax.lax.conv_general_dilated(
            y, wgt, window_strides=(1, 1), padding=((1, 1), (1, 1)),
            dimension_numbers=("NCHW", "OIHW", "NCHW"))
        y = jnp.maximum(y + b.reshape(1, -1, 1, 1), 0.0)
    n, _, h, w = y.shape
    c3 = w3.shape[1]
    t = jnp.einsum("nchw,cokl->nohkwl", y, w3)        # (n, co, h, kh, w, kw)
    return t.reshape(n, c3, 2 * h, 2 * w) + b3.reshape(1, -1, 1, 1)


# -----------------------------------------------------------------------------
# Main
# -----------------------------------------------------------------------------
if __name__ == "__main__":
    # UpSample(in_c=4, out_c=8) -> convT output channels = 4.
    in_c, out_c = 4, 8
    n, h, w = 2, 16, 16

    key = jax.random.PRNGKey(0)
    k = jax.random.split(key, 7)

    # Parameters in PyTorch layouts:
    #   Conv2d weight (Cout, Cin, 3, 3); ConvTranspose2d weight (Cin, Cout, 2, 2).
    w1 = jax.random.normal(k[0], (out_c, in_c, 3, 3), jnp.float32) * 0.1
    b1 = jax.random.normal(k[1], (out_c,), jnp.float32) * 0.1
    w2 = jax.random.normal(k[2], (out_c, out_c, 3, 3), jnp.float32) * 0.1
    b2 = jax.random.normal(k[3], (out_c,), jnp.float32) * 0.1
    w3 = jax.random.normal(k[4], (out_c, out_c // 2, 2, 2), jnp.float32) * 0.1
    b3 = jax.random.normal(k[5], (out_c // 2,), jnp.float32) * 0.1
    params = ((w1, b1), (w2, b2), (w3, b3))

    x = jax.random.normal(k[6], (n, in_c, h, w), jnp.float32)  # NCHW

    out = jax.block_until_ready(upsample_forward(x, params))
    ref = reference_forward(x, params)

    assert out.shape == (n, out_c // 2, 2 * h, 2 * w), out.shape
    assert jnp.allclose(out, ref, atol=1e-4, rtol=1e-4), float(
        jnp.max(jnp.abs(out - ref)))

    print("KERNEL_OK")
</pallas_src>

<mosaic_0001>
module attributes {stable_mosaic.version = 11 : i64} {
  func.func @upsample_kernel(%arg0: i32, %arg1: memref<1x4x256xf32, #tpu.memory_space<vmem>>, %arg2: memref<8x36xf32, #tpu.memory_space<vmem>>, %arg3: memref<8x1xf32, #tpu.memory_space<vmem>>, %arg4: memref<8x72xf32, #tpu.memory_space<vmem>>, %arg5: memref<8x1xf32, #tpu.memory_space<vmem>>, %arg6: memref<16x8xf32, #tpu.memory_space<vmem>>, %arg7: memref<16x1xf32, #tpu.memory_space<vmem>>, %arg8: memref<1x16x256xf32, #tpu.memory_space<vmem>>) attributes {dimension_semantics = [#tpu.dimension_semantics<parallel>], iteration_bounds = array<i64: 2>, scalar_prefetch = 0 : i64, scratch_operands = 0 : i64, tpu.core_type = #tpu.core_type<tc>, window_params = [{transform_indices = @transform_0, window_bounds = array<i64: 1, 4, 256>}, {pipeline_mode = #tpu.pipeline_mode<synchronous>, transform_indices = @transform_1, window_bounds = array<i64: 8, 36>}, {pipeline_mode = #tpu.pipeline_mode<synchronous>, transform_indices = @transform_2, window_bounds = array<i64: 8, 1>}, {pipeline_mode = #tpu.pipeline_mode<synchronous>, transform_indices = @transform_3, window_bounds = array<i64: 8, 72>}, {pipeline_mode = #tpu.pipeline_mode<synchronous>, transform_indices = @transform_4, window_bounds = array<i64: 8, 1>}, {pipeline_mode = #tpu.pipeline_mode<synchronous>, transform_indices = @transform_5, window_bounds = array<i64: 16, 8>}, {pipeline_mode = #tpu.pipeline_mode<synchronous>, transform_indices = @transform_6, window_bounds = array<i64: 16, 1>}, {transform_indices = @transform_7, window_bounds = array<i64: 1, 16, 256>}]} {
    %0 = tpu.iota {dimensions = array<i32: 1>} : vector<1x256xi32>
    %c16_i32 = arith.constant 16 : i32
    %c0_i32 = arith.constant 0 : i32
    %1 = arith.cmpi eq, %c16_i32, %c0_i32 : i32
    %c1_i32 = arith.constant 1 : i32
    %2 = arith.select %1, %c1_i32, %c16_i32 : i32
    %3 = vector.broadcast %2 : i32 to vector<1x256xi32>
    %4 = arith.remsi %0, %3 : vector<1x256xi32>
    %c0_i32_0 = arith.constant 0 : i32
    %5 = vector.broadcast %c0_i32_0 : i32 to vector<1x256xi32>
    %6 = arith.cmpi ne, %4, %5 : vector<1x256xi32>
    %c0_i32_1 = arith.constant 0 : i32
    %7 = vector.broadcast %c0_i32_1 : i32 to vector<1x256xi32>
    %8 = arith.cmpi slt, %4, %7 : vector<1x256xi32>
    %c0_i32_2 = arith.constant 0 : i32
    %9 = arith.cmpi slt, %2, %c0_i32_2 : i32
    %10 = vector.broadcast %9 : i1 to vector<1x256xi1>
    %11 = vector.broadcast %10 : vector<1x256xi1> to vector<1x256xi1>
    %12 = arith.xori %8, %11 : vector<1x256xi1>
    %13 = arith.andi %12, %6 : vector<1x256xi1>
    %14 = vector.broadcast %2 : i32 to vector<1x256xi32>
    %15 = arith.addi %4, %14 : vector<1x256xi32>
    %16 = arith.select %13, %15, %4 : vector<1x256xi1>, vector<1x256xi32>
    %c1_i32_3 = arith.constant 1 : i32
    %17 = vector.broadcast %c1_i32_3 : i32 to vector<1x256xi32>
    %18 = arith.cmpi sge, %16, %17 : vector<1x256xi32>
    %c15_i32 = arith.constant 15 : i32
    %19 = vector.broadcast %c15_i32 : i32 to vector<1x256xi32>
    %20 = arith.cmpi slt, %16, %19 : vector<1x256xi32>
    %c0 = arith.constant 0 : index
    %c0_4 = arith.constant 0 : index
    %c0_5 = arith.constant 0 : index
    %21 = vector.load %arg1[%c0, %c0_4, %c0_5] : memref<1x4x256xf32, #tpu.memory_space<vmem>>, vector<1x4x256xf32>
    %22 = vector.shape_cast %21 : vector<1x4x256xf32> to vector<4x256xf32>
    %c0_6 = arith.constant 0 : index
    %c0_7 = arith.constant 0 : index
    %23 = vector.load %arg2[%c0_6, %c0_7] : memref<8x36xf32, #tpu.memory_space<vmem>>, vector<8x36xf32>
    %c0_8 = arith.constant 0 : index
    %c0_9 = arith.constant 0 : index
    %24 = vector.load %arg3[%c0_8, %c0_9] : memref<8x1xf32, #tpu.memory_space<vmem>>, vector<8x1xf32>
    %cst = arith.constant 0.000000e+00 : f32
    %25 = vector.broadcast %cst : f32 to vector<4x17xf32>
    %26 = vector.extract_strided_slice %22 {offsets = [0, 0], sizes = [4, 239], strides = [1, 1]} : vector<4x256xf32> to vector<4x239xf32>
    %27 = tpu.concatenate %25, %26 in 1 : vector<4x17xf32>, vector<4x239xf32> -> vector<4x256xf32>
    %cst_10 = arith.constant 0.000000e+00 : f32
    %28 = vector.shape_cast %18 : vector<1x256xi1> to vector<1x256xi1>
    %29 = vector.broadcast %28 : vector<1x256xi1> to vector<4x256xi1>
    %30 = vector.broadcast %cst_10 : f32 to vector<4x256xf32>
    %31 = arith.select %29, %27, %30 : vector<4x256xi1>, vector<4x256xf32>
    %cst_11 = arith.constant 0.000000e+00 : f32
    %32 = vector.broadcast %cst_11 : f32 to vector<4x16xf32>
    %33 = vector.extract_strided_slice %22 {offsets = [0, 0], sizes = [4, 240], strides = [1, 1]} : vector<4x256xf32> to vector<4x240xf32>
    %34 = tpu.concatenate %32, %33 in 1 : vector<4x16xf32>, vector<4x240xf32> -> vector<4x256xf32>
    %cst_12 = arith.constant 0.000000e+00 : f32
    %35 = vector.broadcast %cst_12 : f32 to vector<4x15xf32>
    %36 = vector.extract_strided_slice %22 {offsets = [0, 0], sizes = [4, 241], strides = [1, 1]} : vector<4x256xf32> to vector<4x241xf32>
    %37 = tpu.concatenate %35, %36 in 1 : vector<4x15xf32>, vector<4x241xf32> -> vector<4x256xf32>
    %cst_13 = arith.constant 0.000000e+00 : f32
    %38 = vector.shape_cast %20 : vector<1x256xi1> to vector<1x256xi1>
    %39 = vector.broadcast %38 : vector<1x256xi1> to vector<4x256xi1>
    %40 = vector.broadcast %cst_13 : f32 to vector<4x256xf32>
    %41 = arith.select %39, %37, %40 : vector<4x256xi1>, vector<4x256xf32>
    %cst_14 = arith.constant 0.000000e+00 : f32
    %42 = vector.broadcast %cst_14 : f32 to vector<4x1xf32>
    %43 = vector.extract_strided_slice %22 {offsets = [0, 0], sizes = [4, 255], strides = [1, 1]} : vector<4x256xf32> to vector<4x255xf32>
    %44 = tpu.concatenate %42, %43 in 1 : vector<4x1xf32>, vector<4x255xf32> -> vector<4x256xf32>
    %cst_15 = arith.constant 0.000000e+00 : f32
    %45 = vector.shape_cast %18 : vector<1x256xi1> to vector<1x256xi1>
    %46 = vector.broadcast %45 : vector<1x256xi1> to vector<4x256xi1>
    %47 = vector.broadcast %cst_15 : f32 to vector<4x256xf32>
    %48 = arith.select %46, %44, %47 : vector<4x256xi1>, vector<4x256xf32>
    %cst_16 = arith.constant 0.000000e+00 : f32
    %49 = vector.broadcast %cst_16 : f32 to vector<4x1xf32>
    %50 = vector.extract_strided_slice %22 {offsets = [0, 1], sizes = [4, 255], strides = [1, 1]} : vector<4x256xf32> to vector<4x255xf32>
    %51 = tpu.concatenate %50, %49 in 1 : vector<4x255xf32>, vector<4x1xf32> -> vector<4x256xf32>
    %cst_17 = arith.constant 0.000000e+00 : f32
    %52 = vector.shape_cast %20 : vector<1x256xi1> to vector<1x256xi1>
    %53 = vector.broadcast %52 : vector<1x256xi1> to vector<4x256xi1>
    %54 = vector.broadcast %cst_17 : f32 to vector<4x256xf32>
    %55 = arith.select %53, %51, %54 : vector<4x256xi1>, vector<4x256xf32>
    %cst_18 = arith.constant 0.000000e+00 : f32
    %56 = vector.broadcast %cst_18 : f32 to vector<4x15xf32>
    %57 = vector.extract_strided_slice %22 {offsets = [0, 15], sizes = [4, 241], strides = [1, 1]} : vector<4x256xf32> to vector<4x241xf32>
    %58 = tpu.concatenate %57, %56 in 1 : vector<4x241xf32>, vector<4x15xf32> -> vector<4x256xf32>
    %cst_19 = arith.constant 0.000000e+00 : f32
    %59 = vector.shape_cast %18 : vector<1x256xi1> to vector<1x256xi1>
    %60 = vector.broadcast %59 : vector<1x256xi1> to vector<4x256xi1>
    %61 = vector.broadcast %cst_19 : f32 to vector<4x256xf32>
    %62 = arith.select %60, %58, %61 : vector<4x256xi1>, vector<4x256xf32>
    %cst_20 = arith.constant 0.000000e+00 : f32
    %63 = vector.broadcast %cst_20 : f32 to vector<4x16xf32>
    %64 = vector.extract_strided_slice %22 {offsets = [0, 16], sizes = [4, 240], strides = [1, 1]} : vector<4x256xf32> to vector<4x240xf32>
    %65 = tpu.concatenate %64, %63 in 1 : vector<4x240xf32>, vector<4x16xf32> -> vector<4x256xf32>
    %cst_21 = arith.constant 0.000000e+00 : f32
    %66 = vector.broadcast %cst_21 : f32 to vector<4x17xf32>
    %67 = vector.extract_strided_slice %22 {offsets = [0, 17], sizes = [4, 239], strides = [1, 1]} : vector<4x256xf32> to vector<4x239xf32>
    %68 = tpu.concatenate %67, %66 in 1 : vector<4x239xf32>, vector<4x17xf32> -> vector<4x256xf32>
    %cst_22 = arith.constant 0.000000e+00 : f32
    %69 = vector.shape_cast %20 : vector<1x256xi1> to vector<1x256xi1>
    %70 = vector.broadcast %69 : vector<1x256xi1> to vector<4x256xi1>
    %71 = vector.broadcast %cst_22 : f32 to vector<4x256xf32>
    %72 = arith.select %70, %68, %71 : vector<4x256xi1>, vector<4x256xf32>
    %73 = tpu.concatenate %31, %34, %41, %48, %22, %55, %62, %65, %72 in 0 : vector<4x256xf32>, vector<4x256xf32>, vector<4x256xf32>, vector<4x256xf32>, vector<4x256xf32>, vector<4x256xf32>, vector<4x256xf32>, vector<4x256xf32>, vector<4x256xf32> -> vector<36x256xf32>
    %cst_23 = arith.constant dense<0.000000e+00> : vector<8x256xf32>
    %74 = tpu.matmul %23, %73, %cst_23 {dimension_numbers = #tpu.dot_dimension_numbers<[1], [0], [0], [1], [0, 0, 1, 1], [], []>} : vector<8x36xf32>, vector<36x256xf32>, vector<8x256xf32> -> vector<8x256xf32>
    %75 = vector.broadcast %24 : vector<8x1xf32> to vector<8x256xf32>
    %76 = arith.addf %74, %75 : vector<8x256xf32>
    %cst_24 = arith.constant 0.000000e+00 : f32
    %77 = vector.broadcast %cst_24 : f32 to vector<8x256xf32>
    %78 = arith.maximumf %76, %77 : vector<8x256xf32>
    %c0_25 = arith.constant 0 : index
    %c0_26 = arith.constant 0 : index
    %79 = vector.load %arg4[%c0_25, %c0_26] : memref<8x72xf32, #tpu.memory_space<vmem>>, vector<8x72xf32>
    %c0_27 = arith.constant 0 : index
    %c0_28 = arith.constant 0 : index
    %80 = vector.load %arg5[%c0_27, %c0_28] : memref<8x1xf32, #tpu.memory_space<vmem>>, vector<8x1xf32>
    %cst_29 = arith.constant 0.000000e+00 : f32
    %81 = vector.broadcast %cst_29 : f32 to vector<8x17xf32>
    %82 = vector.extract_strided_slice %78 {offsets = [0, 0], sizes = [8, 239], strides = [1, 1]} : vector<8x256xf32> to vector<8x239xf32>
    %83 = tpu.concatenate %81, %82 in 1 : vector<8x17xf32>, vector<8x239xf32> -> vector<8x256xf32>
    %cst_30 = arith.constant 0.000000e+00 : f32
    %84 = vector.shape_cast %18 : vector<1x256xi1> to vector<1x256xi1>
    %85 = vector.broadcast %84 : vector<1x256xi1> to vector<8x256xi1>
    %86 = vector.broadcast %cst_30 : f32 to vector<8x256xf32>
    %87 = arith.select %85, %83, %86 : vector<8x256xi1>, vector<8x256xf32>
    %cst_31 = arith.constant 0.000000e+00 : f32
    %88 = vector.broadcast %cst_31 : f32 to vector<8x16xf32>
    %89 = vector.extract_strided_slice %78 {offsets = [0, 0], sizes = [8, 240], strides = [1, 1]} : vector<8x256xf32> to vector<8x240xf32>
    %90 = tpu.concatenate %88, %89 in 1 : vector<8x16xf32>, vector<8x240xf32> -> vector<8x256xf32>
    %cst_32 = arith.constant 0.000000e+00 : f32
    %91 = vector.broadcast %cst_32 : f32 to vector<8x15xf32>
    %92 = vector.extract_strided_slice %78 {offsets = [0, 0], sizes = [8, 241], strides = [1, 1]} : vector<8x256xf32> to vector<8x241xf32>
    %93 = tpu.concatenate %91, %92 in 1 : vector<8x15xf32>, vector<8x241xf32> -> vector<8x256xf32>
    %cst_33 = arith.constant 0.000000e+00 : f32
    %94 = vector.shape_cast %20 : vector<1x256xi1> to vector<1x256xi1>
    %95 = vector.broadcast %94 : vector<1x256xi1> to vector<8x256xi1>
    %96 = vector.broadcast %cst_33 : f32 to vector<8x256xf32>
    %97 = arith.select %95, %93, %96 : vector<8x256xi1>, vector<8x256xf32>
    %cst_34 = arith.constant 0.000000e+00 : f32
    %98 = vector.broadcast %cst_34 : f32 to vector<8x1xf32>
    %99 = vector.extract_strided_slice %78 {offsets = [0, 0], sizes = [8, 255], strides = [1, 1]} : vector<8x256xf32> to vector<8x255xf32>
    %100 = tpu.concatenate %98, %99 in 1 : vector<8x1xf32>, vector<8x255xf32> -> vector<8x256xf32>
    %cst_35 = arith.constant 0.000000e+00 : f32
    %101 = vector.shape_cast %18 : vector<1x256xi1> to vector<1x256xi1>
    %102 = vector.broadcast %101 : vector<1x256xi1> to vector<8x256xi1>
    %103 = vector.broadcast %cst_35 : f32 to vector<8x256xf32>
    %104 = arith.select %102, %100, %103 : vector<8x256xi1>, vector<8x256xf32>
    %cst_36 = arith.constant 0.000000e+00 : f32
    %105 = vector.broadcast %cst_36 : f32 to vector<8x1xf32>
    %106 = vector.extract_strided_slice %78 {offsets = [0, 1], sizes = [8, 255], strides = [1, 1]} : vector<8x256xf32> to vector<8x255xf32>
    %107 = tpu.concatenate %106, %105 in 1 : vector<8x255xf32>, vector<8x1xf32> -> vector<8x256xf32>
    %cst_37 = arith.constant 0.000000e+00 : f32
    %108 = vector.shape_cast %20 : vector<1x256xi1> to vector<1x256xi1>
    %109 = vector.broadcast %108 : vector<1x256xi1> to vector<8x256xi1>
    %110 = vector.broadcast %cst_37 : f32 to vector<8x256xf32>
    %111 = arith.select %109, %107, %110 : vector<8x256xi1>, vector<8x256xf32>
    %cst_38 = arith.constant 0.000000e+00 : f32
    %112 = vector.broadcast %cst_38 : f32 to vector<8x15xf32>
    %113 = vector.extract_strided_slice %78 {offsets = [0, 15], sizes = [8, 241], strides = [1, 1]} : vector<8x256xf32> to vector<8x241xf32>
    %114 = tpu.concatenate %113, %112 in 1 : vector<8x241xf32>, vector<8x15xf32> -> vector<8x256xf32>
    %cst_39 = arith.constant 0.000000e+00 : f32
    %115 = vector.shape_cast %18 : vector<1x256xi1> to vector<1x256xi1>
    %116 = vector.broadcast %115 : vector<1x256xi1> to vector<8x256xi1>
    %117 = vector.broadcast %cst_39 : f32 to vector<8x256xf32>
    %118 = arith.select %116, %114, %117 : vector<8x256xi1>, vector<8x256xf32>
    %cst_40 = arith.constant 0.000000e+00 : f32
    %119 = vector.broadcast %cst_40 : f32 to vector<8x16xf32>
    %120 = vector.extract_strided_slice %78 {offsets = [0, 16], sizes = [8, 240], strides = [1, 1]} : vector<8x256xf32> to vector<8x240xf32>
    %121 = tpu.concatenate %120, %119 in 1 : vector<8x240xf32>, vector<8x16xf32> -> vector<8x256xf32>
    %cst_41 = arith.constant 0.000000e+00 : f32
    %122 = vector.broadcast %cst_41 : f32 to vector<8x17xf32>
    %123 = vector.extract_strided_slice %78 {offsets = [0, 17], sizes = [8, 239], strides = [1, 1]} : vector<8x256xf32> to vector<8x239xf32>
    %124 = tpu.concatenate %123, %122 in 1 : vector<8x239xf32>, vector<8x17xf32> -> vector<8x256xf32>
    %cst_42 = arith.constant 0.000000e+00 : f32
    %125 = vector.shape_cast %20 : vector<1x256xi1> to vector<1x256xi1>
    %126 = vector.broadcast %125 : vector<1x256xi1> to vector<8x256xi1>
    %127 = vector.broadcast %cst_42 : f32 to vector<8x256xf32>
    %128 = arith.select %126, %124, %127 : vector<8x256xi1>, vector<8x256xf32>
    %129 = tpu.concatenate %87, %90, %97, %104, %78, %111, %118, %121, %128 in 0 : vector<8x256xf32>, vector<8x256xf32>, vector<8x256xf32>, vector<8x256xf32>, vector<8x256xf32>, vector<8x256xf32>, vector<8x256xf32>, vector<8x256xf32>, vector<8x256xf32> -> vector<72x256xf32>
    %cst_43 = arith.constant dense<0.000000e+00> : vector<8x256xf32>
    %130 = tpu.matmul %79, %129, %cst_43 {dimension_numbers = #tpu.dot_dimension_numbers<[1], [0], [0], [1], [0, 0, 1, 1], [], []>} : vector<8x72xf32>, vector<72x256xf32>, vector<8x256xf32> -> vector<8x256xf32>
    %131 = vector.broadcast %80 : vector<8x1xf32> to vector<8x256xf32>
    %132 = arith.addf %130, %131 : vector<8x256xf32>
    %cst_44 = arith.constant 0.000000e+00 : f32
    %133 = vector.broadcast %cst_44 : f32 to vector<8x256xf32>
    %134 = arith.maximumf %132, %133 : vector<8x256xf32>
    %c0_45 = arith.constant 0 : index
    %c0_46 = arith.constant 0 : index
    %135 = vector.load %arg6[%c0_45, %c0_46] : memref<16x8xf32, #tpu.memory_space<vmem>>, vector<16x8xf32>
    %cst_47 = arith.constant dense<0.000000e+00> : vector<16x256xf32>
    %136 = tpu.matmul %135, %134, %cst_47 {dimension_numbers = #tpu.dot_dimension_numbers<[1], [0], [0], [1], [0, 0, 1, 1], [], []>} : vector<16x8xf32>, vector<8x256xf32>, vector<16x256xf32> -> vector<16x256xf32>
    %c0_48 = arith.constant 0 : index
    %c0_49 = arith.constant 0 : index
    %137 = vector.load %arg7[%c0_48, %c0_49] : memref<16x1xf32, #tpu.memory_space<vmem>>, vector<16x1xf32>
    %138 = vector.broadcast %137 : vector<16x1xf32> to vector<16x256xf32>
    %139 = arith.addf %136, %138 : vector<16x256xf32>
    %c0_50 = arith.constant 0 : index
    %c0_51 = arith.constant 0 : index
    %c0_52 = arith.constant 0 : index
    %140 = vector.load %arg8[%c0_50, %c0_51, %c0_52] : memref<1x16x256xf32, #tpu.memory_space<vmem>>, vector<1x16x256xf32>
    %141 = vector.shape_cast %140 : vector<1x16x256xf32> to vector<16x256xf32>
    %142 = vector.shape_cast %139 : vector<16x256xf32> to vector<1x16x256xf32>
    tpu.vector_store %arg8[%c0_50, %c0_51, %c0_52], %142 {strides = array<i32>} : memref<1x16x256xf32, #tpu.memory_space<vmem>>, vector<1x16x256xf32>,
    return
  }
  func.func @transform_0(%arg0: i32) -> (i32, i32, i32) {
    %c0_i32 = arith.constant 0 : i32
    %c0_i32_0 = arith.constant 0 : i32
    %c0_i32_1 = arith.constant 0 : i32
    return %arg0, %c0_i32, %c0_i32_0 : i32, i32, i32
  }
  func.func @transform_1(%arg0: i32) -> (i32, i32) {
    %c0_i32 = arith.constant 0 : i32
    %c0_i32_0 = arith.constant 0 : i32
    %c0_i32_1 = arith.constant 0 : i32
    return %c0_i32, %c0_i32_0 : i32, i32
  }
  func.func @transform_2(%arg0: i32) -> (i32, i32) {
    %c0_i32 = arith.constant 0 : i32
    %c0_i32_0 = arith.constant 0 : i32
    %c0_i32_1 = arith.constant 0 : i32
    return %c0_i32, %c0_i32_0 : i32, i32
  }
  func.func @transform_3(%arg0: i32) -> (i32, i32) {
    %c0_i32 = arith.constant 0 : i32
    %c0_i32_0 = arith.constant 0 : i32
    %c0_i32_1 = arith.constant 0 : i32
    return %c0_i32, %c0_i32_0 : i32, i32
  }
  func.func @transform_4(%arg0: i32) -> (i32, i32) {
    %c0_i32 = arith.constant 0 : i32
    %c0_i32_0 = arith.constant 0 : i32
    %c0_i32_1 = arith.constant 0 : i32
    return %c0_i32, %c0_i32_0 : i32, i32
  }
  func.func @transform_5(%arg0: i32) -> (i32, i32) {
    %c0_i32 = arith.constant 0 : i32
    %c0_i32_0 = arith.constant 0 : i32
    %c0_i32_1 = arith.constant 0 : i32
    return %c0_i32, %c0_i32_0 : i32, i32
  }
  func.func @transform_6(%arg0: i32) -> (i32, i32) {
    %c0_i32 = arith.constant 0 : i32
    %c0_i32_0 = arith.constant 0 : i32
    %c0_i32_1 = arith.constant 0 : i32
    return %c0_i32, %c0_i32_0 : i32, i32
  }
  func.func @transform_7(%arg0: i32) -> (i32, i32, i32) {
    %c0_i32 = arith.constant 0 : i32
    %c0_i32_0 = arith.constant 0 : i32
    %c0_i32_1 = arith.constant 0 : i32
    return %arg0, %c0_i32, %c0_i32_0 : i32, i32, i32
  }
}

</mosaic_0001>

<llo_original>
// kernel: tile.0
$region0: #{tile.0}
  %s0 = inlined_call_operand.vmem [shape: f32[4,1,1,4], index: 0, kind: input, shape index: {}]
  %s1 = inlined_call_operand.vmem [shape: f32[16,1], index: 1, kind: output, shape index: {}]
  $region1: #{tile.0} parent=0
    #allocation0 [shape = 'u8[4096]{0}', space=vmem, size = 0x1000, scoped, tag = 'scoped mem for input reshape']
    %s3 = sshllo.u32 0, 4
    %v4 = vld [vmem:[%s0] sm:%s3]
    %5 = vst [vmem:[#allocation0] sm:%s3] %v4
    %v6 = vld [vmem:[#allocation0] sm:$0xf]
    %vm7 = vcmask 7168
    %8 = vst.msk [vmem:[%s1] ss:$4 sm:$0xf] %vm7, %v6
    %v9 = vld [vmem:[#allocation0] sm:$0xf]
    %10 = vrot.lane.b32.xlu0 %v9, 127
    %v11 = vpop.permute.xlu0 %10
    %vm12 = vcmask 7168
    %s13 = scalar_lea.vmem %s1, 1
    %14 = vst.msk [vmem:[%s13] ss:$4 sm:$0xf] %vm12, %v11
    %v15 = vld [vmem:[#allocation0] sm:$0xf]
    %16 = vrot.lane.b32.xlu0 %v15, 126
    %v17 = vpop.permute.xlu0 %16
    %vm18 = vcmask 7168
    %s19 = scalar_lea.vmem %s1, 2
    %20 = vst.msk [vmem:[%s19] ss:$4 sm:$0xf] %vm18, %v17
    %v21 = vld [vmem:[#allocation0] sm:$0xf]
    %22 = vrot.lane.b32.xlu0 %v21, 125
    %v23 = vpop.permute.xlu0 %22
    %vm24 = vcmask 7168
    %s25 = scalar_lea.vmem %s1, 3
    %26 = vst.msk [vmem:[%s25] ss:$4 sm:$0xf] %vm24, %v23

// kernel: tile.6
$region0: #{tile.6}
  #allocation0 [shape = 's32[1]{0}', space=sflag, size = 0x4, scoped, tag = 'scoped memory for tile.6']
  %s0 = inlined_call_operand.vmem [shape: f32[4], index: 0, kind: input, shape index: {}]
  %s1 = inlined_call_operand.vmem [shape: f32[4,1,1,4], index: 1, kind: output, shape index: {}]
  // Predicated region
  $region2: #{tile.6} parent=0 // pred_check
    _
  $region3: #{tile.6} parent=0 // pred_check_branch
    %3 = sbr.rel (0) target = $region5
  $region4: #{tile.6} parent=0 // pred_region
    _
  $region5: #{tile.6} parent=0 // pred_fallthru
    _
  %v4 = vld [vmem:[%s0] ss:$0 sm:$0xff]
  %5 = vst [vmem:[%s1] sm:$0xf] %v4

// kernel: upsample_forward.1
$region0: #{upsample_forward.1}
  #allocation0 [shape = 'u32[]', space=smem, size = 0x4, offset = 0x4, fixed_abs, tag = 'smem constant byte address 0x4 - core index']
  #allocation1 [shape = 'u32[144,128]{1,0:T(1,128)}', space=vmem, size = 0x12000, scoped, tag = 'internal scratch']
  %s0 = inlined_call_operand.vmem [shape: f32[2,4,256], index: 0, kind: input, shape index: {}]
  %s1 = inlined_call_operand.vmem [shape: f32[8,36], index: 1, kind: input, shape index: {}]
  %s2 = inlined_call_operand.vmem [shape: f32[8,1], index: 2, kind: input, shape index: {}]
  %s3 = inlined_call_operand.vmem [shape: f32[8,72], index: 3, kind: input, shape index: {}]
  %s4 = inlined_call_operand.vmem [shape: f32[8,1], index: 4, kind: input, shape index: {}]
  %s5 = inlined_call_operand.vmem [shape: f32[16,8], index: 5, kind: input, shape index: {}]
  %s6 = inlined_call_operand.vmem [shape: f32[16,1], index: 6, kind: input, shape index: {}]
  %s7 = inlined_call_operand.vmem [shape: f32[2,16,256], index: 7, kind: output, shape index: {}]
  %s8 = sld [smem:[#allocation0]]
  $region61: #{upsample_forward.1} parent=0
    _
  %s10 = ssub.s32 1, %s8
  %s11 = scalar_select 0, %s10, %s8
  loop: start=0, step=1, limit=4
  $region2: #{upsample_forward.1} parent=0 // loop_pre_header
    _
  $region3: #{upsample_forward.1} parent=0 // loop_header
    %s13 = sphi 0, %s17
    %p14 = scmp.ge.s32.totalorder %s13, 4
    %s23 = sphi 0, %s25
    %s26 = sphi 0, %s23
    %s27 = sphi 0, %s26
    %s43 = sphi 0, %s27
    %s47 = sphi 0, %s47
    %s49 = sphi 0, %s47
    %s50 = sphi 0, %s49
    %s64 = sphi 0, %s50
    %s68 = sphi 0, %s68
    %s70 = sphi 0, %s68
    %s71 = sphi 0, %s70
    %s85 = sphi 0, %s71
    %s89 = sphi 0, %s89
    %s91 = sphi 0, %s89
    %s92 = sphi 0, %s91
    %s106 = sphi 0, %s92
    %s110 = sphi 0, %s110
    %s112 = sphi 0, %s110
    %s113 = sphi 0, %s112
    %s127 = sphi 0, %s113
    %s131 = sphi 0, %s131
    %s133 = sphi 0, %s131
    %s134 = sphi 0, %s133
    %s148 = sphi 0, %s134
    %s152 = sphi 0, %s152
    %s154 = sphi 0, %s152
    %s155 = sphi 0, %s154
    %s169 = sphi 0, %s155
    %s175 = sphi 0, %s177
    %s178 = sphi 0, %s175
    %s179 = sphi 0, %s178
    %s195 = sphi 0, %s179
  $region4: #{upsample_forward.1} parent=0 // loop_header_branch
    %16 = sbr.rel (%p14) target = $region8
  $region5: #{upsample_forward.1} parent=0 // loop_body
    %s18 = ssub.s32 %s13, 1
    %s19 = ssub.s32 %s13, 2
    %s20 = sadd.s32 %s13, 1
    %s21 = ssub.s32 %s13, %s20
    %p22 = scmp.eq.s32.totalorder %s21, 0
    %s24 = sadd.s32 %s23, 1
    %s25 = scalar_select %p22, %s23, %s24
    %p28 = pneg %p22
    %p29 = scmp.eq.s32.totalorder %s13, 1
    %p30 = por %p28, %p29
    %p31 = scmp.ne.s32.totalorder %s23, %s26
    %p32 = scmp.eq.s32.totalorder %s13, 0
    %p33 = por %p31, %p32
    %p34 = scmp.ne.s32.totalorder %s23, %s26
    %p35 = scmp.eq.s32.totalorder %s18, 1
    %p36 = por %p34, %p35
    %p37 = scmp.ne.s32.totalorder %s26, %s27
    %p38 = scmp.eq.s32.totalorder %s18, 0
    %p39 = por %p37, %p38
    %p40 = scmp.ne.s32.totalorder %s26, %s27
    %p41 = scmp.eq.s32.totalorder %s19, 1
    %p42 = por %p40, %p41
    %p44 = scmp.ne.s32.totalorder %s27, %s43
    %p45 = scmp.eq.s32.totalorder %s19, 0
    %p46 = por %p44, %p45
    %s48 = sadd.s32 %s47, 1
    %p51 = scmp.eq.s32.totalorder %s13, 1
    %p52 = scmp.ne.s32.totalorder %s47, %s49
    %p53 = scmp.eq.s32.totalorder %s13, 0
    %p54 = por %p52, %p53
    %p55 = scmp.ne.s32.totalorder %s47, %s49
    %p56 = scmp.eq.s32.totalorder %s18, 1
    %p57 = por %p55, %p56
    %p58 = scmp.ne.s32.totalorder %s49, %s50
    %p59 = scmp.eq.s32.totalorder %s18, 0
    %p60 = por %p58, %p59
    %p61 = scmp.ne.s32.totalorder %s49, %s50
    %p62 = scmp.eq.s32.totalorder %s19, 1
    %p63 = por %p61, %p62
    %p65 = scmp.ne.s32.totalorder %s50, %s64
    %p66 = scmp.eq.s32.totalorder %s19, 0
    %p67 = por %p65, %p66
    %s69 = sadd.s32 %s68, 1
    %p72 = scmp.eq.s32.totalorder %s13, 1
    %p73 = scmp.ne.s32.totalorder %s68, %s70
    %p74 = scmp.eq.s32.totalorder %s13, 0
    %p75 = por %p73, %p74
    %p76 = scmp.ne.s32.totalorder %s68, %s70
    %p77 = scmp.eq.s32.totalorder %s18, 1
    %p78 = por %p76, %p77
    %p79 = scmp.ne.s32.totalorder %s70, %s71
    %p80 = scmp.eq.s32.totalorder %s18, 0
    %p81 = por %p79, %p80
    %p82 = scmp.ne.s32.totalorder %s70, %s71
    %p83 = scmp.eq.s32.totalorder %s19, 1
    %p84 = por %p82, %p83
    %p86 = scmp.ne.s32.totalorder %s71, %s85
    %p87 = scmp.eq.s32.totalorder %s19, 0
    %p88 = por %p86, %p87
    %s90 = sadd.s32 %s89, 1
    %p93 = scmp.eq.s32.totalorder %s13, 1
    %p94 = scmp.ne.s32.totalorder %s89, %s91
    %p95 = scmp.eq.s32.totalorder %s13, 0
    %p96 = por %p94, %p95
    %p97 = scmp.ne.s32.totalorder %s89, %s91
    %p98 = scmp.eq.s32.totalorder %s18, 1
    %p99 = por %p97, %p98
    %p100 = scmp.ne.s32.totalorder %s91, %s92
    %p101 = scmp.eq.s32.totalorder %s18, 0
    %p102 = por %p100, %p101
    %p103 = scmp.ne.s32.totalorder %s91, %s92
    %p104 = scmp.eq.s32.totalorder %s19, 1
    %p105 = por %p103, %p104
    %p107 = scmp.ne.s32.totalorder %s92, %s106
    %p108 = scmp.eq.s32.totalorder %s19, 0
    %p109 = por %p107, %p108
    %s111 = sadd.s32 %s110, 1
    %p114 = scmp.eq.s32.totalorder %s13, 1
    %p115 = scmp.ne.s32.totalorder %s110, %s112
    %p116 = scmp.eq.s32.totalorder %s13, 0
    %p117 = por %p115, %p116
    %p118 = scmp.ne.s32.totalorder %s110, %s112
    %p119 = scmp.eq.s32.totalorder %s18, 1
    %p120 = por %p118, %p119
    %p121 = scmp.ne.s32.totalorder %s112, %s113
    %p122 = scmp.eq.s32.totalorder %s18, 0
    %p123 = por %p121, %p122
    %p124 = scmp.ne.s32.totalorder %s112, %s113
    %p125 = scmp.eq.s32.totalorder %s19, 1
    %p126 = por %p124, %p125
    %p128 = scmp.ne.s32.totalorder %s113, %s127
    %p129 = scmp.eq.s32.totalorder %s19, 0
    %p130 = por %p128, %p129
    %s132 = sadd.s32 %s131, 1
    %p135 = scmp.eq.s32.totalorder %s13, 1
    %p136 = scmp.ne.s32.totalorder %s131, %s133
    %p137 = scmp.eq.s32.totalorder %s13, 0
    %p138 = por %p136, %p137
    %p139 = scmp.ne.s32.totalorder %s131, %s133
    %p140 = scmp.eq.s32.totalorder %s18, 1
    %p141 = por %p139, %p140
    %p142 = scmp.ne.s32.totalorder %s133, %s134
    %p143 = scmp.eq.s32.totalorder %s18, 0
    %p144 = por %p142, %p143
    %p145 = scmp.ne.s32.totalorder %s133, %s134
    %p146 = scmp.eq.s32.totalorder %s19, 1
    %p147 = por %p145, %p146
    %p149 = scmp.ne.s32.totalorder %s134, %s148
    %p150 = scmp.eq.s32.totalorder %s19, 0
    %p151 = por %p149, %p150
    %s153 = sadd.s32 %s152, 1
    %p156 = scmp.eq.s32.totalorder %s13, 1
    %p157 = scmp.ne.s32.totalorder %s152, %s154
    %p158 = scmp.eq.s32.totalorder %s13, 0
    %p159 = por %p157, %p158
    %p160 = scmp.ne.s32.totalorder %s152, %s154
    %p161 = scmp.eq.s32.totalorder %s18, 1
    %p162 = por %p160, %p161
    %p163 = scmp.ne.s32.totalorder %s154, %s155
    %p164 = scmp.eq.s32.totalorder %s18, 0
    %p165 = por %p163, %p164
    %p166 = scmp.ne.s32.totalorder %s154, %s155
    %p167 = scmp.eq.s32.totalorder %s19, 1
    %p168 = por %p166, %p167
    %p170 = scmp.ne.s32.totalorder %s155, %s169
    %p171 = scmp.eq.s32.totalorder %s19, 0
    %p172 = por %p170, %p171
    %s173 = ssub.s32 %s13, %s20
    %p174 = scmp.eq.s32.totalorder %s173, 0
    %s176 = sadd.s32 %s175, 1
    %s177 = scalar_select %p174, %s175, %s176
    %p180 = pneg %p174
    %p181 = scmp.eq.s32.totalorder %s13, 1
    %p182 = por %p180, %p181
    %p183 = scmp.ne.s32.totalorder %s175, %s178
    %p184 = scmp.eq.s32.totalorder %s13, 0
    %p185 = por %p183, %p184
    %p186 = scmp.ne.s32.totalorder %s175, %s178
    %p187 = scmp.eq.s32.totalorder %s18, 1
    %p188 = por %p186, %p187
    %p189 = scmp.ne.s32.totalorder %s178, %s179
    %p190 = scmp.eq.s32.totalorder %s18, 0
    %p191 = por %p189, %p190
    %p192 = scmp.ne.s32.totalorder %s178, %s179
    %p193 = scmp.eq.s32.totalorder %s19, 1
    %p194 = por %p192, %p193
    %p196 = scmp.ne.s32.totalorder %s179, %s195
    %p197 = scmp.eq.s32.totalorder %s19, 0
    %p198 = por %p196, %p197
    %p199 = scmp.le.s32.totalorder 1, %s13
    %p200 = scmp.lt.s32.totalorder %s13, 3
    %p201 = pnand %p199, %p200
    %p202 = pneg %p201
    // Predicated region
    $region9: #{upsample_forward.1} parent=5 // pred_check
      _
    $region10: #{upsample_forward.1} parent=5 // pred_check_branch
      %204 = sbr.rel (%p201) target = $region12
    $region11: #{upsample_forward.1} parent=5 // pred_region
      %s205 = ssub.s32 %s13, 1
      // Predicated region
      $region13: #{upsample_forward.1} parent=11 // pred_check
        %p206 = pneg %p60
      $region14: #{upsample_forward.1} parent=11 // pred_check_branch
        %208 = sbr.rel (%p206) target = $region16
      $region15: #{upsample_forward.1} parent=11 // pred_region
        _
      $region16: #{upsample_forward.1} parent=11 // pred_fallthru
        _
      // Predicated region
      $region17: #{upsample_forward.1} parent=11 // pred_check
        %p209 = pneg %p81
      $region18: #{upsample_forward.1} parent=11 // pred_check_branch
        %211 = sbr.rel (%p209) target = $region20
      $region19: #{upsample_forward.1} parent=11 // pred_region
        _
      $region20: #{upsample_forward.1} parent=11 // pred_fallthru
        _
      // Predicated region
      $region21: #{upsample_forward.1} parent=11 // pred_check
        %p212 = pneg %p102
      $region22: #{upsample_forward.1} parent=11 // pred_check_branch
        %214 = sbr.rel (%p212) target = $region24
      $region23: #{upsample_forward.1} parent=11 // pred_region
        _
      $region24: #{upsample_forward.1} parent=11 // pred_fallthru
        _
      // Predicated region
      $region25: #{upsample_forward.1} parent=11 // pred_check
        %p215 = pneg %p123
      $region26: #{upsample_forward.1} parent=11 // pred_check_branch
        %217 = sbr.rel (%p215) target = $region28
      $region27: #{upsample_forward.1} parent=11 // pred_region
        _
      $region28: #{upsample_forward.1} parent=11 // pred_fallthru
        _
      // Predicated region
      $region29: #{upsample_forward.1} parent=11 // pred_check
        %p218 = pneg %p144
      $region30: #{upsample_forward.1} parent=11 // pred_check_branch
        %220 = sbr.rel (%p218) target = $region32
      $region31: #{upsample_forward.1} parent=11 // pred_region
        _
      $region32: #{upsample_forward.1} parent=11 // pred_fallthru
        _
      // Predicated region
      $region33: #{upsample_forward.1} parent=11 // pred_check
        %p221 = pneg %p165
      $region34: #{upsample_forward.1} parent=11 // pred_check_branch
        %223 = sbr.rel (%p221) target = $region36
      $region35: #{upsample_forward.1} parent=11 // pred_region
        _
      $region36: #{upsample_forward.1} parent=11 // pred_fallthru
        _
    $region12: #{upsample_forward.1} parent=5 // pred_fallthru
      _
    %p224 = scmp.lt.s32.totalorder %s13, 2
    // Predicated region
    $region37: #{upsample_forward.1} parent=5 // pred_check
      %p225 = pneg %p224
    $region38: #{upsample_forward.1} parent=5 // pred_check_branch
      %227 = sbr.rel (%p225) target = $region40
    $region39: #{upsample_forward.1} parent=5 // pred_region
      // Predicated region
      $region41: #{upsample_forward.1} parent=39 // pred_check
        %p228 = pneg %p33
      $region42: #{upsample_forward.1} parent=39 // pred_check_branch
        %230 = sbr.rel (%p228) target = $region44
      $region43: #{upsample_forward.1} parent=39 // pred_region
        %p231 = scmp.lt.s32.totalorder %s13, 1
        %s232 = scalar_select %p231, %s13, 1
        %s233 = smul.addr %s232, 2
        %s234 = smul.addr %s233, 4
        %s235 = scalar_lea.vmem %s0, %s234
      $region44: #{upsample_forward.1} parent=39 // pred_fallthru
        _
    $region40: #{upsample_forward.1} parent=5 // pred_fallthru
      _
    %p236 = scmp.le.s32.totalorder 1, %s13
    %p237 = scmp.lt.s32.totalorder %s13, 3
    %p238 = pnand %p236, %p237
    %p239 = pneg %p238
    // Predicated region
    $region45: #{upsample_forward.1} parent=5 // pred_check
      _
    $region46: #{upsample_forward.1} parent=5 // pred_check_branch
      %241 = sbr.rel (%p238) target = $region48
    $region47: #{upsample_forward.1} parent=5 // pred_region
      %s242 = ssub.s32 %s13, 1
      %p243 = scmp.lt.s32.totalorder %s18, 1
      %s244 = scalar_select %p243, %s18, 1
      %s245 = smul.addr %s244, 2
      %s246 = smul.addr %s245, 4
      %s247 = scalar_lea.vmem %s0, %s246
      %p248 = pneg %p39
      %p249 = pneg %p36
      %p250 = pneg %p60
      %p251 = pneg %p57
      %p252 = pneg %p81
      %p253 = pneg %p78
      %p254 = pneg %p102
      %p255 = pneg %p99
      %p256 = pneg %p123
      %p257 = pneg %p120
      %p258 = pneg %p144
      %p259 = pneg %p141
      %p260 = pneg %p165
      %p261 = pneg %p162
      %p262 = pneg %p191
      %p263 = pneg %p188
      %p264 = scmp.lt.s32.totalorder %s18, 1
      %s265 = scalar_select %p264, %s18, 1
      %s266 = smul.addr %s265, 4
      %s267 = smul.addr %s266, 8
      %s268 = scalar_lea.vmem %s7, %s267
      %p269 = scmp.lt.s32.totalorder %s18, 1
      %s270 = scalar_select %p269, %s18, 1
      %s271 = smul.addr %s270, 2
      %s272 = smul.addr %s271, 4
      %s273 = scalar_lea.vmem %s0, %s272
      %p274 = scmp.lt.s32.totalorder %s18, 1
      %s275 = scalar_select %p274, %s18, 1
      %s276 = smul.addr %s275, 4
      %s277 = smul.addr %s276, 8
      %s278 = scalar_lea.vmem %s7, %s277
      %v279 = vlaneseq
      %v280 = vand.u32 %v279, 127
      %v281 = vadd.s32 %v280, 128
      %vm282 = vcmp.lt.s32.totalorder %v280, 0
      %v283 = vsub.s32 0, %v280
      %v284 = vsel %vm282, %v283, %v280
      %v285 = vshrl.u32 %v284, 4
      %v286 = vand.u32 %v284, 15
      %v287 = vsub.s32 0, %v286
      %v288 = vsel %vm282, %v287, %v286
      %vm289 = vcmp.lt.s32.totalorder %v281, 0
      %v290 = vsub.s32 0, %v281
      %v291 = vsel %vm289, %v290, %v281
      %v292 = vshrl.u32 %v291, 4
      %v293 = vand.u32 %v291, 15
      %v294 = vsub.s32 0, %v293
      %v295 = vsel %vm289, %v294, %v293
      %vm296 = vcmp.ne.s32.totalorder %v288, 0
      %vm297 = vcmp.ne.s32.totalorder %v295, 0
      %vm298 = vcmp.lt.s32.totalorder %v288, 0
      %vm299 = vcmp.lt.s32.totalorder %v295, 0
      %vm300 = vmand %vm298, %vm296
      %vm301 = vmand %vm299, %vm297
      %v302 = vadd.s32 %v288, 16
      %v303 = vadd.s32 %v295, 16
      %v304 = vsel %vm300, %v302, %v288
      %v305 = vsel %vm301, %v303, %v295
      %vm306 = vcmp.ge.s32.totalorder %v304, 1
      %vm307 = vcmp.ge.s32.totalorder %v305, 1
      %vm308 = vcmp.lt.s32.totalorder %v304, 15
      %vm309 = vcmp.lt.s32.totalorder %v305, 15
      %v310 = vld [vmem:[%s273] sm:$0xff]
      %v311 = vld [vmem:[%s1] sm:$0xff]
      %v312 = vld [vmem:[%s2] sm:$0xff]
      %v314 = vcombine.high %v310, %v310
      %315 = vrot.lane.b32.xlu0 %v310, 17
      %v316 = vpop.permute.xlu0 %315
      %317 = vrot.lane.b32.xlu0 %v314, 17
      %v318 = vpop.permute.xlu0 %317
      %vm319 = vcmask 138240
      %v320 = vsel %vm319, %v316, %v318
      %v323 = vsel %vm319, 0.0, %v316
      %v324 = vsel %vm306, 1, 0
      %v325 = vsel %vm307, 1, 0
      %vm326 = vcmp.eq.s32.totalorder %v324, 1
      %vm327 = vcmp.eq.s32.totalorder %v325, 1
      %v328 = vsel %vm326, %v323, 0.0
      %v329 = vsel %vm327, %v320, 0.0
      %330 = vrot.lane.b32.xlu0 %v310, 16
      %v331 = vpop.permute.xlu0 %330
      %332 = vrot.lane.b32.xlu0 %v314, 16
      %v333 = vpop.permute.xlu0 %332
      %vm334 = vcmask 130048
      %v335 = vsel %vm334, %v331, %v333
      %v337 = vsel %vm334, 0.0, %v331
      %338 = vrot.lane.b32.xlu0 %v310, 15
      %v339 = vpop.permute.xlu0 %338
      %340 = vrot.lane.b32.xlu0 %v314, 15
      %v341 = vpop.permute.xlu0 %340
      %vm342 = vcmask 121856
      %v343 = vsel %vm342, %v339, %v341
      %v346 = vsel %vm342, 0.0, %v339
      %v347 = vsel %vm308, 1, 0
      %v348 = vsel %vm309, 1, 0
      %vm349 = vcmp.eq.s32.totalorder %v347, 1
      %vm350 = vcmp.eq.s32.totalorder %v348, 1
      %v351 = vsel %vm349, %v346, 0.0
      %v352 = vsel %vm350, %v343, 0.0
      %353 = vrot.lane.b32.xlu0 %v310, 1
      %v354 = vpop.permute.xlu0 %353
      %355 = vrot.lane.b32.xlu0 %v314, 1
      %v356 = vpop.permute.xlu0 %355
      %vm357 = vcmask 7168
      %v358 = vsel %vm357, %v354, %v356
      %v361 = vsel %vm357, 0.0, %v354
      %v362 = vsel %vm326, %v361, 0.0
      %v363 = vsel %vm327, %v358, 0.0
      %364 = vrot.lane.b32.xlu0 %v310, 127
      %v365 = vpop.permute.xlu0 %364
      %366 = vrot.lane.b32.xlu0 %v314, 127
      %v367 = vpop.permute.xlu0 %366
      %vm368 = vcmask 1039360
      %v369 = vsel %vm368, %v365, %v367
      %v372 = vsel %vm368, %v367, 0.0
      %v373 = vsel %vm349, %v369, 0.0
      %v374 = vsel %vm350, %v372, 0.0
      %375 = vrot.lane.b32.xlu0 %v310, 113
      %v376 = vpop.permute.xlu0 %375
      %377 = vrot.lane.b32.xlu0 %v314, 113
      %v378 = vpop.permute.xlu0 %377
      %vm379 = vcmask 924672
      %v380 = vsel %vm379, %v376, %v378
      %v383 = vsel %vm379, %v378, 0.0
      %v384 = vsel %vm326, %v380, 0.0
      %v385 = vsel %vm327, %v383, 0.0
      %386 = vrot.lane.b32.xlu0 %v310, 112
      %v387 = vpop.permute.xlu0 %386
      %388 = vrot.lane.b32.xlu0 %v314, 112
      %v389 = vpop.permute.xlu0 %388
      %vm390 = vcmask 916480
      %v391 = vsel %vm390, %v387, %v389
      %v393 = vsel %vm390, %v389, 0.0
      %394 = vrot.lane.b32.xlu0 %v310, 111
      %v395 = vpop.permute.xlu0 %394
      %396 = vrot.lane.b32.xlu0 %v314, 111
      %v397 = vpop.permute.xlu0 %396
      %vm398 = vcmask 908288
      %v399 = vsel %vm398, %v395, %v397
      %v402 = vsel %vm398, %v397, 0.0
      %v403 = vsel %vm349, %v399, 0.0
      %v404 = vsel %vm350, %v402, 0.0
      %v406 = vrot.slane %v337, 4
      %v407 = vrot.slane %v335, 4
      %v412 = vrot.slane %v362, 4
      %v413 = vrot.slane %v363, 4
      %v419 = vrot.slane %v373, 4
      %v420 = vrot.slane %v374, 4
      %v424 = vrot.slane %v391, 4
      %v425 = vrot.slane %v393, 4
      %vm428 = vcmask 1043456
      %v429 = vsel %vm428, %v328, %v406
      %v430 = vsel %vm428, %v329, %v407
      %v431 = vsel %vm428, %v351, %v412
      %v432 = vsel %vm428, %v352, %v413
      %v433 = vsel %vm428, %v310, %v419
      %v434 = vsel %vm428, %v314, %v420
      %v435 = vsel %vm428, %v384, %v424
      %v436 = vsel %vm428, %v385, %v425
      %438 = vset.pattern.permute.xlu0 0
      %439 = vperm.xlu0 %438, %v312
      %v440 = vpop.permute.xlu0 %439
      %vm442 = vcmask 293888
      %v444 = vsel %vm442, %v311, 0
      %v447 = vsel %vm428, %v403, 0
      %v450 = vsel %vm428, %v404, 0
      %452 = vmatprep.subr.mxu0 %v430
      %453 = vmatpush1.msra.mxu0 %v429
      %454 = vmatprep.subr.mxu0 %v432
      %455 = vmatpush1.msra.mxu0 %v431
      %456 = vmatprep.subr.mxu0 %v434
      %457 = vmatpush1.msra.mxu0 %v433
      %458 = vmatprep.subr.mxu0 %v436
      %459 = vmatpush1.msra.mxu0 %v435
      %460 = vmatprep.subr.mxu0 %v450
      %461 = vmatpush1.msra.mxu0 %v447
      %462 = vmatprep.subr.mxu0 0.0
      %463 = vmatpush1.msra.mxu0 0.0
      %464 = vmatprep.subr.mxu0 0.0
      %465 = vmatpush1.msra.mxu0 0.0
      %466 = vmatprep.subr.mxu0 0.0
      %467 = vmatpush1.msra.mxu0 0.0
      %468 = vmatprep.subr.mxu0 0.0
      %469 = vmatpush1.msra.mxu0 0.0
      %470 = vmatprep.subr.mxu0 0.0
      %471 = vmatpush1.msra.mxu0 0.0
      %472 = vmatprep.subr.mxu0 0.0
      %473 = vmatpush1.msra.mxu0 0.0
      %474 = vmatprep.subr.mxu0 0.0
      %475 = vmatpush1.msra.mxu0 0.0
      %476 = vmatprep.subr.mxu0 0.0
      %477 = vmatpush1.msra.mxu0 0.0
      %478 = vmatprep.subr.mxu0 0.0
      %479 = vmatpush1.msra.mxu0 0.0
      %480 = vmatprep.subr.mxu0 0.0
      %481 = vmatpush1.msra.mxu0 0.0
      %482 = vmatprep.subr.mxu0 0.0
      %483 = vmatpush1.msra.mxu0 0.0
      %484 = vmatprep.subr.mxu0 0.0
      %485 = vmatpush1.msra.mxu0 0.0
      %486 = vmatprep.subr.mxu0 0.0
      %487 = vmatpush1.msra.mxu0 0.0
      %488 = vmatprep.subr.mxu0 0.0
      %489 = vmatpush1.msra.mxu0 0.0
      %490 = vmatprep.subr.mxu0 0.0
      %491 = vmatpush1.msra.mxu0 0.0
      %492 = vmatprep.subr.mxu0 0.0
      %493 = vmatpush1.msra.mxu0 0.0
      %494 = vmatprep.subr.mxu0 0.0
      %495 = vmatpush1.msra.mxu0 0.0
      %496 = vmatprep.subr.mxu0 0.0
      %497 = vmatpush1.msra.mxu0 0.0
      %498 = vmatprep.subr.mxu0 0.0
      %499 = vmatpush1.msra.mxu0 0.0
      %500 = vmatprep.subr.mxu0 0.0
      %501 = vmatpush1.msra.mxu0 0.0
      %502 = vmatprep.subr.mxu0 0.0
      %503 = vmatpush1.msra.mxu0 0.0
      %504 = vmatprep.subr.mxu0 0.0
      %505 = vmatpush1.msra.mxu0 0.0
      %506 = vmatprep.subr.mxu0 0.0
      %507 = vmatpush1.msra.mxu0 0.0
      %508 = vmatprep.subr.mxu0 0.0
      %509 = vmatpush1.msra.mxu0 0.0
      %510 = vmatprep.subr.mxu0 0.0
      %511 = vmatpush1.msra.mxu0 0.0
      %512 = vmatprep.subr.mxu0 0.0
      %513 = vmatpush1.msra.mxu0 0.0
      %514 = vmatprep.subr.mxu0 0.0
      %515 = vmatpush1.msra.mxu0 0.0
      %516 = vmatprep.mubr.f32.mxu0 0.0
      %517 = vmatmul.mubr.f32.gmra.mrb[0].mxu0 %v444
      %v518 = vpop.f32.mrb[0].mxu0
      %v519 = vadd.f32 %v440, %v518
      %v520 = vpop.f32.mrb[0].mxu0
      %v521 = vadd.f32 %v440, %v520
      %522 = vdwg.mxu0
      %v523 = vmax.f32 %v519, 0.0
      %v524 = vmax.f32 %v521, 0.0
      %v525 = vld [vmem:[%s3] sm:$0xff]
      %v526 = vld [vmem:[%s4] sm:$0xff]
      %529 = vrot.lane.b32.xlu0 %v523, 17
      %v530 = vpop.permute.xlu0 %529
      %531 = vrot.lane.b32.xlu0 %v524, 17
      %v532 = vpop.permute.xlu0 %531
      %v533 = vsel %vm319, %v530, %v532
      %v536 = vsel %vm319, 0.0, %v530
      %v537 = vsel %vm326, %v536, 0.0
      %v538 = vsel %vm327, %v533, 0.0
      %539 = vrot.lane.b32.xlu0 %v523, 16
      %v540 = vpop.permute.xlu0 %539
      %541 = vrot.lane.b32.xlu0 %v524, 16
      %v542 = vpop.permute.xlu0 %541
      %v543 = vsel %vm334, %v540, %v542
      %v546 = vsel %vm334, 0.0, %v540
      %547 = vrot.lane.b32.xlu0 %v523, 15
      %v548 = vpop.permute.xlu0 %547
      %549 = vrot.lane.b32.xlu0 %v524, 15
      %v550 = vpop.permute.xlu0 %549
      %v551 = vsel %vm342, %v548, %v550
      %v554 = vsel %vm342, 0.0, %v548
      %v555 = vsel %vm349, %v554, 0.0
      %v556 = vsel %vm350, %v551, 0.0
      %557 = vrot.lane.b32.xlu0 %v523, 1
      %v558 = vpop.permute.xlu0 %557
      %559 = vrot.lane.b32.xlu0 %v524, 1
      %v560 = vpop.permute.xlu0 %559
      %v561 = vsel %vm357, %v558, %v560
      %v564 = vsel %vm357, 0.0, %v558
      %v565 = vsel %vm326, %v564, 0.0
      %v566 = vsel %vm327, %v561, 0.0
      %567 = vrot.lane.b32.xlu0 %v523, 127
      %v568 = vpop.permute.xlu0 %567
      %569 = vrot.lane.b32.xlu0 %v524, 127
      %v570 = vpop.permute.xlu0 %569
      %v571 = vsel %vm368, %v568, %v570
      %v574 = vsel %vm368, %v570, 0.0
      %v575 = vsel %vm349, %v571, 0.0
      %v576 = vsel %vm350, %v574, 0.0
      %577 = vrot.lane.b32.xlu0 %v523, 113
      %v578 = vpop.permute.xlu0 %577
      %579 = vrot.lane.b32.xlu0 %v524, 113
      %v580 = vpop.permute.xlu0 %579
      %v581 = vsel %vm379, %v578, %v580
      %v584 = vsel %vm379, %v580, 0.0
      %v585 = vsel %vm326, %v581, 0.0
      %v586 = vsel %vm327, %v584, 0.0
      %587 = vrot.lane.b32.xlu0 %v523, 112
      %v588 = vpop.permute.xlu0 %587
      %589 = vrot.lane.b32.xlu0 %v524, 112
      %v590 = vpop.permute.xlu0 %589
      %v591 = vsel %vm390, %v588, %v590
      %v594 = vsel %vm390, %v590, 0.0
      %595 = vrot.lane.b32.xlu0 %v523, 111
      %v596 = vpop.permute.xlu0 %595
      %597 = vrot.lane.b32.xlu0 %v524, 111
      %v598 = vpop.permute.xlu0 %597
      %v599 = vsel %vm398, %v596, %v598
      %v602 = vsel %vm398, %v598, 0.0
      %v603 = vsel %vm349, %v599, 0.0
      %v604 = vsel %vm350, %v602, 0.0
      %606 = vset.pattern.permute.xlu0 0
      %607 = vperm.xlu0 %606, %v526
      %v608 = vpop.permute.xlu0 %607
      %vm610 = vcmask 588800
      %v612 = vsel %vm610, %v525, 0
      %614 = vmatprep.subr.mxu0 %v538
      %615 = vmatpush1.msra.mxu0 %v537
      %616 = vmatprep.subr.mxu0 %v543
      %617 = vmatpush1.msra.mxu0 %v546
      %618 = vmatprep.subr.mxu0 %v556
      %619 = vmatpush1.msra.mxu0 %v555
      %620 = vmatprep.subr.mxu0 %v566
      %621 = vmatpush1.msra.mxu0 %v565
      %622 = vmatprep.subr.mxu0 %v524
      %623 = vmatpush1.msra.mxu0 %v523
      %624 = vmatprep.subr.mxu0 %v576
      %625 = vmatpush1.msra.mxu0 %v575
      %626 = vmatprep.subr.mxu0 %v586
      %627 = vmatpush1.msra.mxu0 %v585
      %628 = vmatprep.subr.mxu0 %v594
      %629 = vmatpush1.msra.mxu0 %v591
      %630 = vmatprep.subr.mxu0 %v604
      %631 = vmatpush1.msra.mxu0 %v603
      %632 = vmatprep.subr.mxu0 0.0
      %633 = vmatpush1.msra.mxu0 0.0
      %634 = vmatprep.subr.mxu0 0.0
      %635 = vmatpush1.msra.mxu0 0.0
      %636 = vmatprep.subr.mxu0 0.0
      %637 = vmatpush1.msra.mxu0 0.0
      %638 = vmatprep.subr.mxu0 0.0
      %639 = vmatpush1.msra.mxu0 0.0
      %640 = vmatprep.subr.mxu0 0.0
      %641 = vmatpush1.msra.mxu0 0.0
      %642 = vmatprep.subr.mxu0 0.0
      %643 = vmatpush1.msra.mxu0 0.0
      %644 = vmatprep.subr.mxu0 0.0
      %645 = vmatpush1.msra.mxu0 0.0
      %646 = vmatprep.subr.mxu0 0.0
      %647 = vmatpush1.msra.mxu0 0.0
      %648 = vmatprep.subr.mxu0 0.0
      %649 = vmatpush1.msra.mxu0 0.0
      %650 = vmatprep.subr.mxu0 0.0
      %651 = vmatpush1.msra.mxu0 0.0
      %652 = vmatprep.subr.mxu0 0.0
      %653 = vmatpush1.msra.mxu0 0.0
      %654 = vmatprep.subr.mxu0 0.0
      %655 = vmatpush1.msra.mxu0 0.0
      %656 = vmatprep.subr.mxu0 0.0
      %657 = vmatpush1.msra.mxu0 0.0
      %658 = vmatprep.subr.mxu0 0.0
      %659 = vmatpush1.msra.mxu0 0.0
      %660 = vmatprep.subr.mxu0 0.0
      %661 = vmatpush1.msra.mxu0 0.0
      %662 = vmatprep.subr.mxu0 0.0
      %663 = vmatpush1.msra.mxu0 0.0
      %664 = vmatprep.subr.mxu0 0.0
      %665 = vmatpush1.msra.mxu0 0.0
      %666 = vmatprep.subr.mxu0 0.0
      %667 = vmatpush1.msra.mxu0 0.0
      %668 = vmatprep.subr.mxu0 0.0
      %669 = vmatpush1.msra.mxu0 0.0
      %670 = vmatprep.subr.mxu0 0.0
      %671 = vmatpush1.msra.mxu0 0.0
      %672 = vmatprep.subr.mxu0 0.0
      %673 = vmatpush1.msra.mxu0 0.0
      %674 = vmatprep.subr.mxu0 0.0
      %675 = vmatpush1.msra.mxu0 0.0
      %676 = vmatprep.subr.mxu0 0.0
      %677 = vmatpush1.msra.mxu0 0.0
      %678 = vmatprep.mubr.f32.mxu0 0.0
      %679 = vmatmul.mubr.f32.gmra.mrb[0].mxu0 %v612
      %v680 = vpop.f32.mrb[0].mxu0
      %v681 = vadd.f32 %v608, %v680
      %v682 = vpop.f32.mrb[0].mxu0
      %v683 = vadd.f32 %v608, %v682
      %684 = vdwg.mxu0
      %v685 = vmax.f32 %v681, 0.0
      %v686 = vmax.f32 %v683, 0.0
      %v687 = vld [vmem:[%s5] sm:$0xff]
      %v688 = vld [vmem:[%s5 + $0x8] sm:$0xff]
      %v689 = vld [vmem:[%s6] sm:$0xff]
      %v690 = vld [vmem:[%s6 + $0x8] sm:$0xff]
      %692 = vset.pattern.permute.xlu0 0
      %693 = vperm.xlu0 %692, %v689
      %v694 = vpop.permute.xlu0 %693
      %697 = vset.pattern.permute.xlu0 0
      %698 = vperm.xlu0 %697, %v690
      %v699 = vpop.permute.xlu0 %698
      %vm701 = vcmask 64512
      %v703 = vsel %vm701, %v687, 0
      %v706 = vsel %vm701, %v688, 0
      %708 = vmatprep.subr.mxu0 %v686
      %709 = vmatpush1.msra.mxu0 %v685
      %710 = vmatprep.subr.mxu0 0.0
      %711 = vmatpush1.msra.mxu0 0.0
      %712 = vmatprep.subr.mxu0 0.0
      %713 = vmatpush1.msra.mxu0 0.0
      %714 = vmatprep.subr.mxu0 0.0
      %715 = vmatpush1.msra.mxu0 0.0
      %716 = vmatprep.subr.mxu0 0.0
      %717 = vmatpush1.msra.mxu0 0.0
      %718 = vmatprep.subr.mxu0 0.0
      %719 = vmatpush1.msra.mxu0 0.0
      %720 = vmatprep.subr.mxu0 0.0
      %721 = vmatpush1.msra.mxu0 0.0
      %722 = vmatprep.subr.mxu0 0.0
      %723 = vmatpush1.msra.mxu0 0.0
      %724 = vmatprep.subr.mxu0 0.0
      %725 = vmatpush1.msra.mxu0 0.0
      %726 = vmatprep.subr.mxu0 0.0
      %727 = vmatpush1.msra.mxu0 0.0
      %728 = vmatprep.subr.mxu0 0.0
      %729 = vmatpush1.msra.mxu0 0.0
      %730 = vmatprep.subr.mxu0 0.0
      %731 = vmatpush1.msra.mxu0 0.0
      %732 = vmatprep.subr.mxu0 0.0
      %733 = vmatpush1.msra.mxu0 0.0
      %734 = vmatprep.subr.mxu0 0.0
      %735 = vmatpush1.msra.mxu0 0.0
      %736 = vmatprep.subr.mxu0 0.0
      %737 = vmatpush1.msra.mxu0 0.0
      %738 = vmatprep.subr.mxu0 0.0
      %739 = vmatpush1.msra.mxu0 0.0
      %740 = vmatprep.subr.mxu0 0.0
      %741 = vmatpush1.msra.mxu0 0.0
      %742 = vmatprep.subr.mxu0 0.0
      %743 = vmatpush1.msra.mxu0 0.0
      %744 = vmatprep.subr.mxu0 0.0
      %745 = vmatpush1.msra.mxu0 0.0
      %746 = vmatprep.subr.mxu0 0.0
      %747 = vmatpush1.msra.mxu0 0.0
      %748 = vmatprep.subr.mxu0 0.0
      %749 = vmatpush1.msra.mxu0 0.0
      %750 = vmatprep.subr.mxu0 0.0
      %751 = vmatpush1.msra.mxu0 0.0
      %752 = vmatprep.subr.mxu0 0.0
      %753 = vmatpush1.msra.mxu0 0.0
      %754 = vmatprep.subr.mxu0 0.0
      %755 = vmatpush1.msra.mxu0 0.0
      %756 = vmatprep.subr.mxu0 0.0
      %757 = vmatpush1.msra.mxu0 0.0
      %758 = vmatprep.subr.mxu0 0.0
      %759 = vmatpush1.msra.mxu0 0.0
      %760 = vmatprep.subr.mxu0 0.0
      %761 = vmatpush1.msra.mxu0 0.0
      %762 = vmatprep.subr.mxu0 0.0
      %763 = vmatpush1.msra.mxu0 0.0
      %764 = vmatprep.subr.mxu0 0.0
      %765 = vmatpush1.msra.mxu0 0.0
      %766 = vmatprep.subr.mxu0 0.0
      %767 = vmatpush1.msra.mxu0 0.0
      %768 = vmatprep.subr.mxu0 0.0
      %769 = vmatpush1.msra.mxu0 0.0
      %770 = vmatprep.subr.mxu0 0.0
      %771 = vmatpush1.msra.mxu0 0.0
      %772 = vmatprep.mubr.f32.mxu0 0.0
      %773 = vmatmul.mubr.f32.gmra.mrb[0].mxu0 %v703
      %v774 = vpop.f32.mrb[0].mxu0
      %v775 = vadd.f32 %v694, %v774
      %v776 = vpop.f32.mrb[0].mxu0
      %v777 = vadd.f32 %v694, %v776
      %778 = vmatprep.mubr.f32.mxu0 0.0
      %779 = vmatmul.mubr.f32.gmra.mrb[0].mxu0 %v706
      %v780 = vpop.f32.mrb[0].mxu0
      %v781 = vadd.f32 %v699, %v780
      %v782 = vpop.f32.mrb[0].mxu0
      %v783 = vadd.f32 %v699, %v782
      %784 = vdwg.mxu0
      %785 = vst [vmem:[%s278] sm:$0xff] %v775
      %786 = vst [vmem:[%s278 + $0x8] sm:$0xff] %v777
      %787 = vst [vmem:[%s278 + $0x10] sm:$0xff] %v781
      %788 = vst [vmem:[%s278 + $0x18] sm:$0xff] %v783
      %p789 = scmp.lt.s32.totalorder %s18, 1
      %s790 = scalar_select %p789, %s18, 1
      %s791 = smul.addr %s790, 4
      %s792 = smul.addr %s791, 8
      %s793 = scalar_lea.vmem %s7, %s792
      // Predicated region
      $region49: #{upsample_forward.1} parent=47 // pred_check
        %p794 = pneg %p188
      $region50: #{upsample_forward.1} parent=47 // pred_check_branch
        %796 = sbr.rel (%p794) target = $region52
      $region51: #{upsample_forward.1} parent=47 // pred_region
        _
      $region52: #{upsample_forward.1} parent=47 // pred_fallthru
        _
    $region48: #{upsample_forward.1} parent=5 // pred_fallthru
      _
    %p797 = scmp.le.s32.totalorder 2, %s13
    // Predicated region
    $region53: #{upsample_forward.1} parent=5 // pred_check
      %p798 = pneg %p797
    $region54: #{upsample_forward.1} parent=5 // pred_check_branch
      %800 = sbr.rel (%p798) target = $region56
    $region55: #{upsample_forward.1} parent=5 // pred_region
      %s801 = ssub.s32 %s13, 2
      // Predicated region
      $region57: #{upsample_forward.1} parent=55 // pred_check
        %p802 = pneg %p194
      $region58: #{upsample_forward.1} parent=55 // pred_check_branch
        %804 = sbr.rel (%p802) target = $region60
      $region59: #{upsample_forward.1} parent=55 // pred_region
        %p805 = scmp.lt.s32.totalorder %s19, 1
        %s806 = scalar_select %p805, %s19, 1
        %s807 = smul.addr %s806, 4
        %s808 = smul.addr %s807, 8
        %s809 = scalar_lea.vmem %s7, %s808
      $region60: #{upsample_forward.1} parent=55 // pred_fallthru
        _
    $region56: #{upsample_forward.1} parent=5 // pred_fallthru
      _
  $region6: #{upsample_forward.1} parent=0 // loop_footer
    %s17 = sadd.s32 1, %s13
  $region7: #{upsample_forward.1} parent=0 // loop_footer_branch
    %12 = sbr.rel target = $region3
  $region8: #{upsample_forward.1} parent=0 // loop_exit
    _

</llo_original>
